<compile_context>
chip_gen: v6e
topology: v6e:2x2x1
jax: 0.10.0
libtpu: 0.0.40
codegen_flags: <defaults>
</compile_context>

<pallas_src>
import functools

import jax
import jax.numpy as jnp
from jax import lax
from jax.experimental import pallas as pl
from jax.experimental.pallas import tpu as pltpu

BN_EPS = 1e-5


# ---------------------------------------------------------------------------
# VMEM / tiling helpers
# ---------------------------------------------------------------------------
def _vmem_limit_bytes():
    """~half the chip's VMEM: 64 MiB on v5e/v6e (128 MiB), 32 MiB on v7x (64 MiB)."""
    cap = None
    try:
        cap = getattr(pltpu.get_tpu_info(), "vmem_capacity_bytes", None)
    except Exception:
        cap = None
    if not cap:
        cap = 64 * 1024 * 1024  # conservative fallback (assume v7x-sized VMEM)
    return int(min(64 * 1024 * 1024, max(cap // 2, 16 * 1024 * 1024)))


def _pick_tile_l(L, Cin, Cout, vmem_limit, target=2048):
    """Pick a lane-dense L tile (multiple of 128) within the VMEM budget.

    Returns (tile_l, l_pad) with tile_l | l_pad and l_pad >= L.
    """
    # Budget: double-buffered x and out tiles + (conservatively 2x) weights.
    weight_bytes = 4 * (2 * Cout * Cin + Cout * Cout + 8 * Cout)
    avail = max(vmem_limit - 2 * weight_bytes, 1 << 20)
    max_tl = int(0.6 * avail) // (8 * (Cin + Cout))
    max_tl = max(128, (max_tl // 128) * 128)
    target = min(target, max_tl)

    if L % 128 == 0:
        t = max(128, min(target, L))
        t -= t % 128
        while L % t != 0:
            t -= 128
        return max(t, 128), L  # no padding needed

    l128 = ((L + 127) // 128) * 128
    t = min(target, l128)
    t = max(128, t - t % 128)
    l_pad = ((L + t - 1) // t) * t
    return t, l_pad


# ---------------------------------------------------------------------------
# Kernels
# ---------------------------------------------------------------------------
def _stats1_kernel(x_ref, w1_ref, sum_ref, sumsq_ref):
    """Per-batch partial sum / sumsq of y1 = W1 @ x (padded x columns contribute 0)."""
    @pl.when(pl.program_id(1) == 0)
    def _():
        sum_ref[...] = jnp.zeros_like(sum_ref)
        sumsq_ref[...] = jnp.zeros_like(sumsq_ref)

    y1 = jnp.dot(w1_ref[...], x_ref[...], preferred_element_type=jnp.float32)
    sum_ref[...] += jnp.sum(y1, axis=1, keepdims=True)
    sumsq_ref[...] += jnp.sum(y1 * y1, axis=1, keepdims=True)


def _stats2_kernel(x_ref, w1s_ref, w2_ref, shift1_ref, sum_ref, sumsq_ref,
                   *, l_actual, tile_l, need_mask):
    """Per-batch partial sum / sumsq of y2 = W2 @ relu(W1'@x + shift1)."""
    @pl.when(pl.program_id(1) == 0)
    def _():
        sum_ref[...] = jnp.zeros_like(sum_ref)
        sumsq_ref[...] = jnp.zeros_like(sumsq_ref)

    h1 = jnp.maximum(
        jnp.dot(w1s_ref[...], x_ref[...], preferred_element_type=jnp.float32)
        + shift1_ref[...], 0.0)
    if need_mask:
        # relu(shift1) on zero-padded columns is nonzero -> mask them out of the stats.
        lane = lax.broadcasted_iota(jnp.int32, h1.shape, 1)
        pos = pl.program_id(1) * tile_l + lane
        h1 = jnp.where(pos < l_actual, h1, 0.0)
    y2 = jnp.dot(w2_ref[...], h1, preferred_element_type=jnp.float32)
    sum_ref[...] += jnp.sum(y2, axis=1, keepdims=True)
    sumsq_ref[...] += jnp.sum(y2 * y2, axis=1, keepdims=True)


def _final_kernel_fused(x_ref, wcat_ref, w2s_ref, vecs_ref, out_ref, *, cout):
    """conv1+skip as one matmul (Cout % 8 == 0 -> aligned sublane split)."""
    x = x_ref[...]
    ycat = jnp.dot(wcat_ref[...], x, preferred_element_type=jnp.float32)  # (2*Cout, tl)
    h1 = jnp.maximum(ycat[:cout, :] + vecs_ref[0], 0.0)     # vecs[0] = shift1
    y2 = jnp.dot(w2s_ref[...], h1, preferred_element_type=jnp.float32)
    h2 = jnp.maximum(y2 + vecs_ref[1], 0.0)                  # vecs[1] = shift2
    out_ref[...] = (h2 + ycat[cout:, :] + vecs_ref[2]).astype(out_ref.dtype)


def _final_kernel_split(x_ref, w1s_ref, ws_ref, w2s_ref, vecs_ref, out_ref):
    """Separate skip matmul (Cout not a multiple of 8: avoid unaligned sublane split)."""
    x = x_ref[...]
    h1 = jnp.maximum(
        jnp.dot(w1s_ref[...], x, preferred_element_type=jnp.float32) + vecs_ref[0], 0.0)
    y2 = jnp.dot(w2s_ref[...], h1, preferred_element_type=jnp.float32)
    h2 = jnp.maximum(y2 + vecs_ref[1], 0.0)
    skip = jnp.dot(ws_ref[...], x, preferred_element_type=jnp.float32)
    out_ref[...] = (h2 + skip + vecs_ref[2]).astype(out_ref.dtype)


# ---------------------------------------------------------------------------
# Wrapper
# ---------------------------------------------------------------------------
def res_block_pallas(x, params, *, tile_l=None):
    """x: (B, Cin, L) float32 (NCL, as in PyTorch). Returns (B, Cout, L)."""
    B, Cin, L = x.shape
    w1, b1, w2, b2, ws, bs, gamma, beta = params
    # b1/b2 are intentionally unused: train-mode BN's mean subtraction cancels a
    # constant per-channel conv bias exactly (matches the biased reference below).
    Cout = w1.shape[0]

    vmem_limit = _vmem_limit_bytes()
    if tile_l is None:
        tile_l, l_pad = _pick_tile_l(L, Cin, Cout, vmem_limit)
    else:
        assert tile_l % 128 == 0 or tile_l == L, (tile_l, L)
        l_pad = ((L + tile_l - 1) // tile_l) * tile_l

    need_pad = l_pad != L
    xp = jnp.pad(x, ((0, 0), (0, 0), (0, l_pad - L))) if need_pad else x

    grid = (B, l_pad // tile_l)
    n = B * L  # actual element count for the batch statistics

    x_spec = pl.BlockSpec((None, Cin, tile_l), lambda b, t: (b, 0, t))

    def rep(shape):
        nd = len(shape)
        return pl.BlockSpec(shape, lambda b, t, nd=nd: (0,) * nd)

    # Per-batch partial accumulators: batch axis 'parallel' (engages both v7x TCs),
    # L-tile axis 'arbitrary' with a resident (Cout,1) block per batch.
    acc_spec = pl.BlockSpec((None, Cout, 1), lambda b, t: (b, 0, 0))
    acc_shapes = (jax.ShapeDtypeStruct((B, Cout, 1), jnp.float32),) * 2
    stats_cp = pltpu.CompilerParams(
        dimension_semantics=("parallel", "arbitrary"),
        vmem_limit_bytes=vmem_limit)

    # ---- pass 1: stats of y1 = W1 @ x --------------------------------------
    cost1 = pl.CostEstimate(
        flops=2 * Cout * Cin * B * l_pad + 3 * Cout * B * l_pad,
        transcendentals=0,
        bytes_accessed=4 * (Cin * B * l_pad + Cout * Cin + 2 * B * Cout))
    psum1, psumsq1 = pl.pallas_call(
        _stats1_kernel,
        out_shape=acc_shapes,
        grid=grid,
        in_specs=[x_spec, rep((Cout, Cin))],
        out_specs=(acc_spec, acc_spec),
        compiler_params=stats_cp,
        cost_estimate=cost1,
    )(xp, w1)
    sum1 = jnp.sum(psum1, axis=0)
    sumsq1 = jnp.sum(psumsq1, axis=0)

    mean1 = sum1 / n
    var1 = jnp.maximum(sumsq1 / n - mean1 * mean1, 0.0)  # guard f32 cancellation
    scale1 = gamma * lax.rsqrt(var1 + BN_EPS)
    shift1 = beta - mean1 * scale1
    w1s = scale1 * w1  # fold BN1 scale into conv1 weights

    # ---- pass 2: stats of y2 = W2 @ relu(W1'@x + shift1) --------------------
    cost2 = pl.CostEstimate(
        flops=2 * (Cout * Cin + Cout * Cout) * B * l_pad + 5 * Cout * B * l_pad,
        transcendentals=0,
        bytes_accessed=4 * (Cin * B * l_pad + Cout * Cin + Cout * Cout
                            + Cout + 2 * B * Cout))
    psum2, psumsq2 = pl.pallas_call(
        functools.partial(_stats2_kernel, l_actual=L, tile_l=tile_l,
                          need_mask=need_pad),
        out_shape=acc_shapes,
        grid=grid,
        in_specs=[x_spec, rep((Cout, Cin)), rep((Cout, Cout)), rep((Cout, 1))],
        out_specs=(acc_spec, acc_spec),
        compiler_params=stats_cp,
        cost_estimate=cost2,
    )(xp, w1s, w2, shift1)
    sum2 = jnp.sum(psum2, axis=0)
    sumsq2 = jnp.sum(psumsq2, axis=0)

    mean2 = sum2 / n
    var2 = jnp.maximum(sumsq2 / n - mean2 * mean2, 0.0)
    scale2 = gamma * lax.rsqrt(var2 + BN_EPS)
    shift2 = beta - mean2 * scale2
    w2s = scale2 * w2  # fold BN2 scale into conv2 weights

    # ---- pass 3: fused apply + residual -------------------------------------
    vecs = jnp.stack([shift1, shift2, bs], axis=0)  # (3, Cout, 1) packed per-channel vecs
    out_spec = pl.BlockSpec((None, Cout, tile_l), lambda b, t: (b, 0, t))
    final_cp = pltpu.CompilerParams(
        dimension_semantics=("parallel", "parallel"),
        vmem_limit_bytes=vmem_limit)

    fused = (Cout % 8 == 0)
    if fused:
        w_top = jnp.concatenate([w1s, ws], axis=0)  # (2*Cout, Cin): conv1' + self_conv
        kernel = functools.partial(_final_kernel_fused, cout=Cout)
        in_specs = [x_spec, rep((2 * Cout, Cin)), rep((Cout, Cout)), rep((3, Cout, 1))]
        args = (xp, w_top, w2s, vecs)
    else:
        kernel = _final_kernel_split
        in_specs = [x_spec, rep((Cout, Cin)), rep((Cout, Cin)),
                    rep((Cout, Cout)), rep((3, Cout, 1))]
        args = (xp, w1s, ws, w2s, vecs)

    cost3 = pl.CostEstimate(
        flops=2 * (2 * Cout * Cin + Cout * Cout) * B * l_pad,
        transcendentals=0,
        bytes_accessed=4 * ((Cin + Cout) * B * l_pad + 2 * Cout * Cin
                            + Cout * Cout + 3 * Cout))
    out = pl.pallas_call(
        kernel,
        out_shape=jax.ShapeDtypeStruct((B, Cout, l_pad), x.dtype),
        grid=grid,
        in_specs=in_specs,
        out_specs=out_spec,
        compiler_params=final_cp,
        cost_estimate=cost3,
    )(*args)

    if need_pad:
        out = out[:, :, :L]
    return out


# ---------------------------------------------------------------------------
# Pure-JAX reference matching the PyTorch forward (training-mode BN)
# ---------------------------------------------------------------------------
def res_block_reference(x, params):
    w1, b1, w2, b2, ws, bs, gamma, beta = params

    def conv1x1(inp, w, b):  # inp: (B, C, L)
        return jnp.einsum('oc,bcl->bol', w, inp) + b.reshape(1, -1, 1)

    def bn_relu(y):
        mean = jnp.mean(y, axis=(0, 2), keepdims=True)
        var = jnp.mean((y - mean) ** 2, axis=(0, 2), keepdims=True)
        yhat = (y - mean) / jnp.sqrt(var + BN_EPS)
        return jnp.maximum(gamma.reshape(1, -1, 1) * yhat +
                           beta.reshape(1, -1, 1), 0.0)

    out = bn_relu(conv1x1(x, w1, b1))
    out = bn_relu(conv1x1(out, w2, b2))
    skip = conv1x1(x, ws, bs)
    return out + skip


def init_params(key, in_channels, out_channels):
    ks = jax.random.split(key, 6)
    w1 = jax.random.normal(ks[0], (out_channels, in_channels), jnp.float32) * 0.2
    b1 = jax.random.normal(ks[1], (out_channels, 1), jnp.float32) * 0.1
    w2 = jax.random.normal(ks[2], (out_channels, out_channels), jnp.float32) * 0.2
    b2 = jax.random.normal(ks[3], (out_channels, 1), jnp.float32) * 0.1
    ws = jax.random.normal(ks[4], (out_channels, in_channels), jnp.float32) * 0.2
    bs = jax.random.normal(ks[5], (out_channels, 1), jnp.float32) * 0.1
    gamma = jnp.ones((out_channels, 1), jnp.float32)   # BatchNorm1d default weight
    beta = jnp.zeros((out_channels, 1), jnp.float32)   # BatchNorm1d default bias
    return (w1, b1, w2, b2, ws, bs, gamma, beta)


if __name__ == "__main__":
    key = jax.random.PRNGKey(0)
    ks = jax.random.split(key, 6)

    def run_case(kx, kp, B, Cin, Cout, L):
        x = jax.random.normal(kx, (B, Cin, L), jnp.float32)
        params = init_params(kp, Cin, Cout)
        out = jax.block_until_ready(res_block_pallas(x, params))
        ref = res_block_reference(x, params)
        assert out.shape == (B, Cout, L), out.shape
        err = float(jnp.max(jnp.abs(out - ref)))
        assert jnp.allclose(out, ref, atol=2e-4, rtol=2e-4), err

    run_case(ks[0], ks[1], 2, 4, 8, 16)    # fused skip matmul, padded-L + masked stats
    run_case(ks[2], ks[3], 2, 4, 6, 16)    # split skip path (Cout % 8 != 0), padded-L
    run_case(ks[4], ks[5], 2, 8, 8, 256)   # fused skip, L multiple of 128 (no padding)

    print("KERNEL_OK")
</pallas_src>

<mosaic_0001>
module attributes {stable_mosaic.version = 11 : i64} {
  func.func @_stats1_kernel(%arg0: i32, %arg1: i32, %arg2: memref<1x4x128xf32, #tpu.memory_space<vmem>>, %arg3: memref<8x4xf32, #tpu.memory_space<vmem>>, %arg4: memref<1x8x1xf32, #tpu.memory_space<vmem>>, %arg5: memref<1x8x1xf32, #tpu.memory_space<vmem>>) attributes {dimension_semantics = [#tpu.dimension_semantics<parallel>, #tpu.dimension_semantics<arbitrary>], iteration_bounds = array<i64: 2, 1>, scalar_prefetch = 0 : i64, scratch_operands = 0 : i64, tpu.core_type = #tpu.core_type<tc>, window_params = [{transform_indices = @transform_0, window_bounds = array<i64: 1, 4, 128>}, {pipeline_mode = #tpu.pipeline_mode<synchronous>, transform_indices = @transform_1, window_bounds = array<i64: 8, 4>}, {transform_indices = @transform_2, window_bounds = array<i64: 1, 8, 1>}, {transform_indices = @transform_3, window_bounds = array<i64: 1, 8, 1>}]} {
    %c0_i32 = arith.constant 0 : i32
    %0 = arith.cmpi eq, %arg1, %c0_i32 : i32
    %1 = arith.extui %0 : i1 to i32
    %c0_i32_0 = arith.constant 0 : i32
    %2 = arith.cmpi ne, %1, %c0_i32_0 : i32
    scf.if %2 {
      %cst_19 = arith.constant 0.000000e+00 : f32
      %24 = vector.broadcast %cst_19 : f32 to vector<8x1xf32>
      %c0_20 = arith.constant 0 : index
      %c0_21 = arith.constant 0 : index
      %c0_22 = arith.constant 0 : index
      %25 = vector.load %arg4[%c0_20, %c0_21, %c0_22] : memref<1x8x1xf32, #tpu.memory_space<vmem>>, vector<1x8x1xf32>
      %26 = vector.shape_cast %25 : vector<1x8x1xf32> to vector<8x1xf32>
      %27 = vector.shape_cast %24 : vector<8x1xf32> to vector<1x8x1xf32>
      tpu.vector_store %arg4[%c0_20, %c0_21, %c0_22], %27 {strides = array<i32>} : memref<1x8x1xf32, #tpu.memory_space<vmem>>, vector<1x8x1xf32>,
      %cst_23 = arith.constant 0.000000e+00 : f32
      %28 = vector.broadcast %cst_23 : f32 to vector<8x1xf32>
      %c0_24 = arith.constant 0 : index
      %c0_25 = arith.constant 0 : index
      %c0_26 = arith.constant 0 : index
      %29 = vector.load %arg5[%c0_24, %c0_25, %c0_26] : memref<1x8x1xf32, #tpu.memory_space<vmem>>, vector<1x8x1xf32>
      %30 = vector.shape_cast %29 : vector<1x8x1xf32> to vector<8x1xf32>
      %31 = vector.shape_cast %28 : vector<8x1xf32> to vector<1x8x1xf32>
      tpu.vector_store %arg5[%c0_24, %c0_25, %c0_26], %31 {strides = array<i32>} : memref<1x8x1xf32, #tpu.memory_space<vmem>>, vector<1x8x1xf32>,
    } else {
    }
    %c0 = arith.constant 0 : index
    %c0_1 = arith.constant 0 : index
    %3 = vector.load %arg3[%c0, %c0_1] : memref<8x4xf32, #tpu.memory_space<vmem>>, vector<8x4xf32>
    %c0_2 = arith.constant 0 : index
    %c0_3 = arith.constant 0 : index
    %c0_4 = arith.constant 0 : index
    %4 = vector.load %arg2[%c0_2, %c0_3, %c0_4] : memref<1x4x128xf32, #tpu.memory_space<vmem>>, vector<1x4x128xf32>
    %5 = vector.shape_cast %4 : vector<1x4x128xf32> to vector<4x128xf32>
    %cst = arith.constant dense<0.000000e+00> : vector<8x128xf32>
    %6 = tpu.matmul %3, %5, %cst {dimension_numbers = #tpu.dot_dimension_numbers<[1], [0], [0], [1], [0, 0, 1, 1], [], []>} : vector<8x4xf32>, vector<4x128xf32>, vector<8x128xf32> -> vector<8x128xf32>
    %c0_5 = arith.constant 0 : index
    %c0_6 = arith.constant 0 : index
    %c0_7 = arith.constant 0 : index
    %7 = vector.load %arg4[%c0_5, %c0_6, %c0_7] : memref<1x8x1xf32, #tpu.memory_space<vmem>>, vector<1x8x1xf32>
    %8 = vector.shape_cast %7 : vector<1x8x1xf32> to vector<8x1xf32>
    %cst_8 = arith.constant dense<0.000000e+00> : vector<8xf32>
    %9 = vector.multi_reduction <add>, %6, %cst_8 [1] : vector<8x128xf32> to vector<8xf32>
    %10 = vector.shape_cast %9 : vector<8xf32> to vector<8x1xf32>
    %11 = arith.addf %8, %10 : vector<8x1xf32>
    %c0_9 = arith.constant 0 : index
    %c0_10 = arith.constant 0 : index
    %c0_11 = arith.constant 0 : index
    %12 = vector.load %arg4[%c0_9, %c0_10, %c0_11] : memref<1x8x1xf32, #tpu.memory_space<vmem>>, vector<1x8x1xf32>
    %13 = vector.shape_cast %12 : vector<1x8x1xf32> to vector<8x1xf32>
    %14 = vector.shape_cast %11 : vector<8x1xf32> to vector<1x8x1xf32>
    tpu.vector_store %arg4[%c0_9, %c0_10, %c0_11], %14 {strides = array<i32>} : memref<1x8x1xf32, #tpu.memory_space<vmem>>, vector<1x8x1xf32>,
    %c0_12 = arith.constant 0 : index
    %c0_13 = arith.constant 0 : index
    %c0_14 = arith.constant 0 : index
    %15 = vector.load %arg5[%c0_12, %c0_13, %c0_14] : memref<1x8x1xf32, #tpu.memory_space<vmem>>, vector<1x8x1xf32>
    %16 = vector.shape_cast %15 : vector<1x8x1xf32> to vector<8x1xf32>
    %17 = arith.mulf %6, %6 : vector<8x128xf32>
    %cst_15 = arith.constant dense<0.000000e+00> : vector<8xf32>
    %18 = vector.multi_reduction <add>, %17, %cst_15 [1] : vector<8x128xf32> to vector<8xf32>
    %19 = vector.shape_cast %18 : vector<8xf32> to vector<8x1xf32>
    %20 = arith.addf %16, %19 : vector<8x1xf32>
    %c0_16 = arith.constant 0 : index
    %c0_17 = arith.constant 0 : index
    %c0_18 = arith.constant 0 : index
    %21 = vector.load %arg5[%c0_16, %c0_17, %c0_18] : memref<1x8x1xf32, #tpu.memory_space<vmem>>, vector<1x8x1xf32>
    %22 = vector.shape_cast %21 : vector<1x8x1xf32> to vector<8x1xf32>
    %23 = vector.shape_cast %20 : vector<8x1xf32> to vector<1x8x1xf32>
    tpu.vector_store %arg5[%c0_16, %c0_17, %c0_18], %23 {strides = array<i32>} : memref<1x8x1xf32, #tpu.memory_space<vmem>>, vector<1x8x1xf32>,
    return
  }
  func.func @transform_0(%arg0: i32, %arg1: i32) -> (i32, i32, i32) {
    %c0_i32 = arith.constant 0 : i32
    %c0_i32_0 = arith.constant 0 : i32
    return %arg0, %c0_i32, %arg1 : i32, i32, i32
  }
  func.func @transform_1(%arg0: i32, %arg1: i32) -> (i32, i32) {
    %c0_i32 = arith.constant 0 : i32
    %c0_i32_0 = arith.constant 0 : i32
    %c0_i32_1 = arith.constant 0 : i32
    return %c0_i32, %c0_i32_0 : i32, i32
  }
  func.func @transform_2(%arg0: i32, %arg1: i32) -> (i32, i32, i32) {
    %c0_i32 = arith.constant 0 : i32
    %c0_i32_0 = arith.constant 0 : i32
    %c0_i32_1 = arith.constant 0 : i32
    return %arg0, %c0_i32, %c0_i32_0 : i32, i32, i32
  }
  func.func @transform_3(%arg0: i32, %arg1: i32) -> (i32, i32, i32) {
    %c0_i32 = arith.constant 0 : i32
    %c0_i32_0 = arith.constant 0 : i32
    %c0_i32_1 = arith.constant 0 : i32
    return %arg0, %c0_i32, %c0_i32_0 : i32, i32, i32
  }
}

</mosaic_0001>

<llo_original>
// kernel: tpu_custom_call.1
$region0: #{tpu_custom_call.1}
  #allocation0 [shape = 'u32[]', space=smem, size = 0x4, offset = 0x4, fixed_abs, tag = 'smem constant byte address 0x4 - core index']
  #allocation1 [shape = 'u32[144,128]{1,0:T(1,128)}', space=vmem, size = 0x12000, scoped, tag = 'internal scratch']
  %s0 = inlined_call_operand.vmem [shape: f32[2,4,128], index: 0, kind: input, shape index: {}]
  %s1 = inlined_call_operand.vmem [shape: f32[8,4], index: 1, kind: input, shape index: {}]
  %s2 = inlined_call_operand.vmem [shape: f32[2,8,1], index: 2, kind: output, shape index: {0}]
  %s3 = inlined_call_operand.vmem [shape: f32[2,8,1], index: 3, kind: output, shape index: {1}]
  %4 = xla_tuple %s2, %s3
  %s5 = sld [smem:[#allocation0]]
  $region53: #{tpu_custom_call.1} parent=0
    _
  %s7 = ssub.s32 1, %s5
  %s8 = scalar_select 0, %s7, %s5
  loop: start=0, step=1, limit=4
  $region2: #{tpu_custom_call.1} parent=0 // loop_pre_header
    _
  $region3: #{tpu_custom_call.1} parent=0 // loop_header
    %s10 = sphi 0, %s14
    %p11 = scmp.ge.s32.totalorder %s10, 4
    %s17 = sphi 0, %s29
    %s18 = sphi 0, %s25
    %s19 = sphi 0, %s17
    %s20 = sphi 0, %s18
    %s21 = sphi 0, %s19
    %s22 = sphi 0, %s20
    %s34 = sphi 0, %s36
    %s37 = sphi 0, %s34
    %s38 = sphi 0, %s37
    %s54 = sphi 0, %s38
    %s58 = sphi 0, %s58
    %s60 = sphi 0, %s58
    %s61 = sphi 0, %s60
    %s75 = sphi 0, %s61
    %s81 = sphi 0, %s83
    %s84 = sphi 0, %s81
    %s85 = sphi 0, %s84
    %s101 = sphi 0, %s85
    %s107 = sphi 0, %s109
    %s110 = sphi 0, %s107
    %s111 = sphi 0, %s110
    %s127 = sphi 0, %s111
  $region4: #{tpu_custom_call.1} parent=0 // loop_header_branch
    %13 = sbr.rel (%p11) target = $region8
  $region5: #{tpu_custom_call.1} parent=0 // loop_body
    %s15 = ssub.s32 %s10, 1
    %s16 = ssub.s32 %s10, 2
    %s23 = sadd.s32 1, %s18
    %p24 = scmp.ge.s32.totalorder %s23, 1
    %s25 = scalar_select %p24, 0, %s23
    %s26 = sadd.s32 1, %s17
    %s27 = scalar_select %p24, %s26, %s17
    %p28 = scmp.ge.s32.totalorder %s27, 2
    %s29 = scalar_select %p28, 0, %s27
    %s30 = ssub.s32 %s17, %s29
    %s31 = ssub.s32 %s18, %s25
    %s32 = sor.u32 %s30, %s31
    %p33 = scmp.eq.s32.totalorder %s32, 0
    %s35 = sadd.s32 %s34, 1
    %s36 = scalar_select %p33, %s34, %s35
    %p39 = pneg %p33
    %p40 = scmp.eq.s32.totalorder %s10, 1
    %p41 = por %p39, %p40
    %p42 = scmp.ne.s32.totalorder %s34, %s37
    %p43 = scmp.eq.s32.totalorder %s10, 0
    %p44 = por %p42, %p43
    %p45 = scmp.ne.s32.totalorder %s34, %s37
    %p46 = scmp.eq.s32.totalorder %s15, 1
    %p47 = por %p45, %p46
    %p48 = scmp.ne.s32.totalorder %s37, %s38
    %p49 = scmp.eq.s32.totalorder %s15, 0
    %p50 = por %p48, %p49
    %p51 = scmp.ne.s32.totalorder %s37, %s38
    %p52 = scmp.eq.s32.totalorder %s16, 1
    %p53 = por %p51, %p52
    %p55 = scmp.ne.s32.totalorder %s38, %s54
    %p56 = scmp.eq.s32.totalorder %s16, 0
    %p57 = por %p55, %p56
    %s59 = sadd.s32 %s58, 1
    %p62 = scmp.eq.s32.totalorder %s10, 1
    %p63 = scmp.ne.s32.totalorder %s58, %s60
    %p64 = scmp.eq.s32.totalorder %s10, 0
    %p65 = por %p63, %p64
    %p66 = scmp.ne.s32.totalorder %s58, %s60
    %p67 = scmp.eq.s32.totalorder %s15, 1
    %p68 = por %p66, %p67
    %p69 = scmp.ne.s32.totalorder %s60, %s61
    %p70 = scmp.eq.s32.totalorder %s15, 0
    %p71 = por %p69, %p70
    %p72 = scmp.ne.s32.totalorder %s60, %s61
    %p73 = scmp.eq.s32.totalorder %s16, 1
    %p74 = por %p72, %p73
    %p76 = scmp.ne.s32.totalorder %s61, %s75
    %p77 = scmp.eq.s32.totalorder %s16, 0
    %p78 = por %p76, %p77
    %s79 = ssub.s32 %s17, %s29
    %p80 = scmp.eq.s32.totalorder %s79, 0
    %s82 = sadd.s32 %s81, 1
    %s83 = scalar_select %p80, %s81, %s82
    %p86 = pneg %p80
    %p87 = scmp.eq.s32.totalorder %s10, 1
    %p88 = por %p86, %p87
    %p89 = scmp.ne.s32.totalorder %s81, %s84
    %p90 = scmp.eq.s32.totalorder %s10, 0
    %p91 = por %p89, %p90
    %p92 = scmp.ne.s32.totalorder %s81, %s84
    %p93 = scmp.eq.s32.totalorder %s15, 1
    %p94 = por %p92, %p93
    %p95 = scmp.ne.s32.totalorder %s84, %s85
    %p96 = scmp.eq.s32.totalorder %s15, 0
    %p97 = por %p95, %p96
    %p98 = scmp.ne.s32.totalorder %s84, %s85
    %p99 = scmp.eq.s32.totalorder %s16, 1
    %p100 = por %p98, %p99
    %p102 = scmp.ne.s32.totalorder %s85, %s101
    %p103 = scmp.eq.s32.totalorder %s16, 0
    %p104 = por %p102, %p103
    %s105 = ssub.s32 %s17, %s29
    %p106 = scmp.eq.s32.totalorder %s105, 0
    %s108 = sadd.s32 %s107, 1
    %s109 = scalar_select %p106, %s107, %s108
    %p112 = pneg %p106
    %p113 = scmp.eq.s32.totalorder %s10, 1
    %p114 = por %p112, %p113
    %p115 = scmp.ne.s32.totalorder %s107, %s110
    %p116 = scmp.eq.s32.totalorder %s10, 0
    %p117 = por %p115, %p116
    %p118 = scmp.ne.s32.totalorder %s107, %s110
    %p119 = scmp.eq.s32.totalorder %s15, 1
    %p120 = por %p118, %p119
    %p121 = scmp.ne.s32.totalorder %s110, %s111
    %p122 = scmp.eq.s32.totalorder %s15, 0
    %p123 = por %p121, %p122
    %p124 = scmp.ne.s32.totalorder %s110, %s111
    %p125 = scmp.eq.s32.totalorder %s16, 1
    %p126 = por %p124, %p125
    %p128 = scmp.ne.s32.totalorder %s111, %s127
    %p129 = scmp.eq.s32.totalorder %s16, 0
    %p130 = por %p128, %p129
    %p131 = scmp.le.s32.totalorder 1, %s10
    %p132 = scmp.lt.s32.totalorder %s10, 3
    %p133 = pnand %p131, %p132
    %p134 = pneg %p133
    // Predicated region
    $region9: #{tpu_custom_call.1} parent=5 // pred_check
      _
    $region10: #{tpu_custom_call.1} parent=5 // pred_check_branch
      %136 = sbr.rel (%p133) target = $region12
    $region11: #{tpu_custom_call.1} parent=5 // pred_region
      %s137 = ssub.s32 %s10, 1
      // Predicated region
      $region13: #{tpu_custom_call.1} parent=11 // pred_check
        %p138 = pneg %p71
      $region14: #{tpu_custom_call.1} parent=11 // pred_check_branch
        %140 = sbr.rel (%p138) target = $region16
      $region15: #{tpu_custom_call.1} parent=11 // pred_region
        _
      $region16: #{tpu_custom_call.1} parent=11 // pred_fallthru
        _
    $region12: #{tpu_custom_call.1} parent=5 // pred_fallthru
      _
    %p141 = scmp.lt.s32.totalorder %s10, 2
    // Predicated region
    $region17: #{tpu_custom_call.1} parent=5 // pred_check
      %p142 = pneg %p141
    $region18: #{tpu_custom_call.1} parent=5 // pred_check_branch
      %144 = sbr.rel (%p142) target = $region20
    $region19: #{tpu_custom_call.1} parent=5 // pred_region
      // Predicated region
      $region21: #{tpu_custom_call.1} parent=19 // pred_check
        %p145 = pneg %p44
      $region22: #{tpu_custom_call.1} parent=19 // pred_check_branch
        %147 = sbr.rel (%p145) target = $region24
      $region23: #{tpu_custom_call.1} parent=19 // pred_region
        %p148 = scmp.lt.s32.totalorder %s17, 1
        %s149 = scalar_select %p148, %s17, 1
        %p150 = scmp.lt.s32.totalorder %s18, 0
        %s151 = scalar_select %p150, %s18, 0
        %s152 = sadd.s32 %s151, %s149
        %s153 = smul.addr %s152, 4
        %s154 = scalar_lea.vmem %s0, %s153
      $region24: #{tpu_custom_call.1} parent=19 // pred_fallthru
        _
    $region20: #{tpu_custom_call.1} parent=5 // pred_fallthru
      _
    %p155 = scmp.le.s32.totalorder 1, %s10
    %p156 = scmp.lt.s32.totalorder %s10, 3
    %p157 = pnand %p155, %p156
    %p158 = pneg %p157
    // Predicated region
    $region25: #{tpu_custom_call.1} parent=5 // pred_check
      _
    $region26: #{tpu_custom_call.1} parent=5 // pred_check_branch
      %160 = sbr.rel (%p157) target = $region28
    $region27: #{tpu_custom_call.1} parent=5 // pred_region
      %s161 = ssub.s32 %s10, 1
      %p162 = scmp.lt.s32.totalorder %s19, 1
      %s163 = scalar_select %p162, %s19, 1
      %p164 = scmp.lt.s32.totalorder %s20, 0
      %s165 = scalar_select %p164, %s20, 0
      %s166 = sadd.s32 %s165, %s163
      %s167 = smul.addr %s166, 4
      %s168 = scalar_lea.vmem %s0, %s167
      %p169 = pneg %p50
      %p170 = pneg %p47
      %p171 = pneg %p71
      %p172 = pneg %p68
      %p173 = pneg %p97
      %p174 = pneg %p94
      %p175 = scmp.lt.s32.totalorder %s19, 1
      %s176 = scalar_select %p175, %s19, 1
      %s177 = smul.addr %s176, 8
      %s178 = scalar_lea.vmem %s2, %s177
      %p179 = pneg %p123
      %p180 = pneg %p120
      %p181 = scmp.lt.s32.totalorder %s19, 1
      %s182 = scalar_select %p181, %s19, 1
      %s183 = smul.addr %s182, 8
      %s184 = scalar_lea.vmem %s3, %s183
      %p185 = scmp.lt.s32.totalorder %s19, 1
      %s186 = scalar_select %p185, %s19, 1
      %p187 = scmp.lt.s32.totalorder %s20, 0
      %s188 = scalar_select %p187, %s20, 0
      %s189 = sadd.s32 %s188, %s186
      %s190 = smul.addr %s189, 4
      %s191 = scalar_lea.vmem %s0, %s190
      %p192 = scmp.lt.s32.totalorder %s19, 1
      %s193 = scalar_select %p192, %s19, 1
      %s194 = smul.addr %s193, 8
      %s195 = scalar_lea.vmem %s2, %s194
      %p196 = scmp.lt.s32.totalorder %s19, 1
      %s197 = scalar_select %p196, %s19, 1
      %s198 = smul.addr %s197, 8
      %s199 = scalar_lea.vmem %s3, %s198
      %p200 = scmp.eq.s32.totalorder %s20, 0
      // Predicated region
      $region29: #{tpu_custom_call.1} parent=27 // pred_check
        %p201 = pneg %p200
      $region30: #{tpu_custom_call.1} parent=27 // pred_check_branch
        %203 = sbr.rel (%p201) target = $region32
      $region31: #{tpu_custom_call.1} parent=27 // pred_region
        %vm204 = vcmask 7168
        %205 = vst.msk [vmem:[%s195] sm:$0xff] %vm204, 0.0
        %206 = vst.msk [vmem:[%s199] sm:$0xff] %vm204, 0.0
      $region32: #{tpu_custom_call.1} parent=27 // pred_fallthru
        _
      %v207 = vld [vmem:[%s1] sm:$0xff]
      %v208 = vld [vmem:[%s191] sm:$0xf]
      %vm209 = vcmask 31744
      %v211 = vsel %vm209, %v207, 0
      %vm213 = vcmask 1043456
      %v215 = vsel %vm213, %v208, 0
      %217 = vmatprep.subr.mxu0 0.0
      %218 = vmatpush1.msra.mxu0 0.0
      %219 = vmatprep.subr.mxu0 0.0
      %220 = vmatpush1.msra.mxu0 0.0
      %221 = vmatprep.subr.mxu0 0.0
      %222 = vmatpush1.msra.mxu0 0.0
      %223 = vmatprep.subr.mxu0 0.0
      %224 = vmatpush1.msra.mxu0 0.0
      %225 = vmatprep.subr.mxu0 0.0
      %226 = vmatpush1.msra.mxu0 0.0
      %227 = vmatprep.subr.mxu0 0.0
      %228 = vmatpush1.msra.mxu0 0.0
      %229 = vmatprep.subr.mxu0 0.0
      %230 = vmatpush1.msra.mxu0 0.0
      %231 = vmatprep.subr.mxu0 0.0
      %232 = vmatpush1.msra.mxu0 0.0
      %233 = vmatprep.subr.mxu0 0.0
      %234 = vmatpush1.msra.mxu0 0.0
      %235 = vmatprep.subr.mxu0 0.0
      %236 = vmatpush1.msra.mxu0 0.0
      %237 = vmatprep.subr.mxu0 0.0
      %238 = vmatpush1.msra.mxu0 0.0
      %239 = vmatprep.subr.mxu0 0.0
      %240 = vmatpush1.msra.mxu0 0.0
      %241 = vmatprep.subr.mxu0 0.0
      %242 = vmatpush1.msra.mxu0 0.0
      %243 = vmatprep.subr.mxu0 0.0
      %244 = vmatpush1.msra.mxu0 0.0
      %245 = vmatprep.subr.mxu0 0.0
      %246 = vmatpush1.msra.mxu0 0.0
      %247 = vmatprep.subr.mxu0 0.0
      %248 = vmatpush1.msra.mxu0 %v215
      %249 = vmatprep.subr.mxu0 0.0
      %250 = vmatpush2.msra.mxu0 0.0
      %251 = vmatprep.subr.mxu0 0.0
      %252 = vmatpush2.msra.mxu0 0.0
      %253 = vmatprep.subr.mxu0 0.0
      %254 = vmatpush2.msra.mxu0 0.0
      %255 = vmatprep.subr.mxu0 0.0
      %256 = vmatpush2.msra.mxu0 0.0
      %257 = vmatprep.subr.mxu0 0.0
      %258 = vmatpush2.msra.mxu0 0.0
      %259 = vmatprep.subr.mxu0 0.0
      %260 = vmatpush2.msra.mxu0 0.0
      %261 = vmatprep.subr.mxu0 0.0
      %262 = vmatpush2.msra.mxu0 0.0
      %263 = vmatprep.subr.mxu0 0.0
      %264 = vmatpush2.msra.mxu0 0.0
      %265 = vmatprep.subr.mxu0 0.0
      %266 = vmatpush2.msra.mxu0 0.0
      %267 = vmatprep.subr.mxu0 0.0
      %268 = vmatpush2.msra.mxu0 0.0
      %269 = vmatprep.subr.mxu0 0.0
      %270 = vmatpush2.msra.mxu0 0.0
      %271 = vmatprep.subr.mxu0 0.0
      %272 = vmatpush2.msra.mxu0 0.0
      %273 = vmatprep.subr.mxu0 0.0
      %274 = vmatpush2.msra.mxu0 0.0
      %275 = vmatprep.subr.mxu0 0.0
      %276 = vmatpush2.msra.mxu0 0.0
      %277 = vmatprep.subr.mxu0 0.0
      %278 = vmatpush2.msra.mxu0 0.0
      %279 = vmatprep.subr.mxu0 0.0
      %280 = vmatpush2.msra.mxu0 0.0
      %281 = vmatprep.mubr.f32.mxu0 0.0
      %282 = vmatmul.mubr.f32.gmra.mxu0 %v211
      %v283 = vpop.f32.mrf.mxu0
      %v284 = vadd.f32 0.0, %v283
      %v285 = vpop.f32.mrf.mxu0
      %286 = vdwg.mxu0
      %v287 = vld [vmem:[%s195] sm:$0xff]
      %288 = vadd.xlane.f32.xlu0 %v284
      %v289 = vpop.xlane.xlu0 %288
      %v290 = vadd.f32 %v287, %v289
      %vm291 = vcmask 7168
      %292 = vst.msk [vmem:[%s195] sm:$0xff] %vm291, %v290
      %v293 = vld [vmem:[%s199] sm:$0xff]
      %v294 = vmul.f32 %v284, %v284
      %295 = vadd.xlane.f32.xlu0 %v294
      %v296 = vpop.xlane.xlu0 %295
      %v297 = vadd.f32 %v293, %v296
      %298 = vst.msk [vmem:[%s199] sm:$0xff] %vm291, %v297
      %p299 = scmp.lt.s32.totalorder %s19, 1
      %s300 = scalar_select %p299, %s19, 1
      %s301 = smul.addr %s300, 8
      %s302 = scalar_lea.vmem %s2, %s301
      %p303 = scmp.lt.s32.totalorder %s19, 1
      %s304 = scalar_select %p303, %s19, 1
      %s305 = smul.addr %s304, 8
      %s306 = scalar_lea.vmem %s3, %s305
      // Predicated region
      $region33: #{tpu_custom_call.1} parent=27 // pred_check
        %p307 = pneg %p94
      $region34: #{tpu_custom_call.1} parent=27 // pred_check_branch
        %309 = sbr.rel (%p307) target = $region36
      $region35: #{tpu_custom_call.1} parent=27 // pred_region
        _
      $region36: #{tpu_custom_call.1} parent=27 // pred_fallthru
        _
      // Predicated region
      $region37: #{tpu_custom_call.1} parent=27 // pred_check
        %p310 = pneg %p120
      $region38: #{tpu_custom_call.1} parent=27 // pred_check_branch
        %312 = sbr.rel (%p310) target = $region40
      $region39: #{tpu_custom_call.1} parent=27 // pred_region
        _
      $region40: #{tpu_custom_call.1} parent=27 // pred_fallthru
        _
    $region28: #{tpu_custom_call.1} parent=5 // pred_fallthru
      _
    %p313 = scmp.le.s32.totalorder 2, %s10
    // Predicated region
    $region41: #{tpu_custom_call.1} parent=5 // pred_check
      %p314 = pneg %p313
    $region42: #{tpu_custom_call.1} parent=5 // pred_check_branch
      %316 = sbr.rel (%p314) target = $region44
    $region43: #{tpu_custom_call.1} parent=5 // pred_region
      %s317 = ssub.s32 %s10, 2
      // Predicated region
      $region45: #{tpu_custom_call.1} parent=43 // pred_check
        %p318 = pneg %p100
      $region46: #{tpu_custom_call.1} parent=43 // pred_check_branch
        %320 = sbr.rel (%p318) target = $region48
      $region47: #{tpu_custom_call.1} parent=43 // pred_region
        %p321 = scmp.lt.s32.totalorder %s21, 1
        %s322 = scalar_select %p321, %s21, 1
        %s323 = smul.addr %s322, 8
        %s324 = scalar_lea.vmem %s2, %s323
      $region48: #{tpu_custom_call.1} parent=43 // pred_fallthru
        _
      // Predicated region
      $region49: #{tpu_custom_call.1} parent=43 // pred_check
        %p325 = pneg %p126
      $region50: #{tpu_custom_call.1} parent=43 // pred_check_branch
        %327 = sbr.rel (%p325) target = $region52
      $region51: #{tpu_custom_call.1} parent=43 // pred_region
        %p328 = scmp.lt.s32.totalorder %s21, 1
        %s329 = scalar_select %p328, %s21, 1
        %s330 = smul.addr %s329, 8
        %s331 = scalar_lea.vmem %s3, %s330
      $region52: #{tpu_custom_call.1} parent=43 // pred_fallthru
        _
    $region44: #{tpu_custom_call.1} parent=5 // pred_fallthru
      _
  $region6: #{tpu_custom_call.1} parent=0 // loop_footer
    %s14 = sadd.s32 1, %s10
  $region7: #{tpu_custom_call.1} parent=0 // loop_footer_branch
    %9 = sbr.rel target = $region3
  $region8: #{tpu_custom_call.1} parent=0 // loop_exit
    _

</llo_original>
